<compile_context>
chip_gen: v7x
topology: tpu7x:2x2x1
jax: 0.10.0
libtpu: 0.0.40
codegen_flags: <defaults>
</compile_context>

<pallas_src>
import functools
import math

import jax
import jax.numpy as jnp
from jax.experimental import pallas as pl
from jax.experimental.pallas import tpu as pltpu


def _mlp_reducer_kernel(x1_ref, x2_ref, w1a_ref, w1b_ref, b1_ref,
                        w2_ref, b2_ref, out_ref):
    """One batch tile of the fused MLP state reducer.

    Activations arrive lane-dense (`pack` logical rows per physical row); the
    weights are block-diagonal replicas, so the math below is exactly the
    per-row MLP with no in-kernel relayout.
    """
    cd = w1a_ref.dtype                                   # compute dtype (bf16 or f32)
    x1 = x1_ref[...].astype(cd)                          # (Tp, Ss*pack)
    x2 = x2_ref[...].astype(cd)                          # (Tp, Ms*pack)

    # fc1 on the split, block-diagonal weights: concat-free, f32 MXU accumulation.
    h = jnp.dot(x1, w1a_ref[...], preferred_element_type=jnp.float32)
    h = h + jnp.dot(x2, w1b_ref[...], preferred_element_type=jnp.float32)
    h = jnp.maximum(h + b1_ref[...].astype(jnp.float32), 0.0)   # (Tp, H1*pack)

    # fc2 + sigmoid (exp/recip land on the EUP slot — effectively free here).
    y = jnp.dot(h.astype(cd), w2_ref[...], preferred_element_type=jnp.float32)
    y = y + b2_ref[...].astype(jnp.float32)                      # (Tp, O*pack)
    out_ref[...] = jax.nn.sigmoid(y).astype(out_ref.dtype)


def _block_diag(w, reps):
    """Block-diagonal replication: (k, m) -> (k*reps, m*reps)."""
    if reps == 1:
        return w
    k, m = w.shape
    out = jnp.zeros((k * reps, m * reps), dtype=w.dtype)
    for i in range(reps):
        out = out.at[i * k:(i + 1) * k, i * m:(i + 1) * m].set(w)
    return out


def _lane_pack(*widths):
    """Smallest pack p such that every width*p is a multiple of 128 lanes."""
    return math.lcm(*(128 // math.gcd(128, int(w)) for w in widths))


@functools.partial(jax.jit, static_argnames=("compute_dtype",))
def mlp_state_reducer(prev_state, agg_msg, w1, b1, w2, b2,
                      compute_dtype=jnp.bfloat16):
    """prev_state: (N, Ss), agg_msg: (N, Ms).

    w1: (I, H1) with I = Ss + Ms, b1: (H1,), w2: (H1, O), b2: (O,)
    (already in (in_features, out_features) layout).  Returns (N, O), O == Ss.
    """
    n, ss = prev_state.shape
    _, ms = agg_msg.shape
    h1 = w1.shape[1]
    o = w2.shape[1]

    # Lane-dense packing factor (4 for the module's Ss=Ms=O=32).  For odd
    # feature widths the required pack blows up; fall back to unpacked then.
    pack = _lane_pack(ss, ms, o)
    if pack > 8:
        pack = 1

    # Pad N up to a multiple of pack (zero rows; sliced off the output).
    # TODO(synk): pad upstream to keep this call boundary copy-free.
    n_pad = ((n + pack - 1) // pack) * pack
    if n_pad != n:
        extra = n_pad - n
        prev_state = jnp.pad(prev_state, ((0, extra), (0, 0)))
        agg_msg = jnp.pad(agg_msg, ((0, extra), (0, 0)))
    n_pack = n_pad // pack

    # Lane-dense (row-major, free) views of the activations.
    x1 = prev_state.reshape(n_pack, ss * pack)
    x2 = agg_msg.reshape(n_pack, ms * pack)

    # Split W1 so the concat never materializes; block-diag replicate so the
    # packed rows multiply through in one MXU pass per layer.
    w1a = _block_diag(w1[:ss].astype(compute_dtype), pack)      # (Ss*p, H1*p)
    w1b = _block_diag(w1[ss:].astype(compute_dtype), pack)      # (Ms*p, H1*p)
    w2c = _block_diag(w2.astype(compute_dtype), pack)           # (H1*p, O*p)
    b1t = jnp.tile(b1.astype(jnp.float32), pack).reshape(1, h1 * pack)
    b2t = jnp.tile(b2.astype(jnp.float32), pack).reshape(1, o * pack)

    # Batch tile: ~8192 logical rows per grid step amortizes per-step overhead;
    # lane-dense blocks keep double-buffered VMEM use well inside 48 MiB.
    target_rows = 8192
    tile_p = max(8, target_rows // pack)
    if n_pack <= tile_p:
        tile_p = n_pack                       # single full-extent block
    else:
        tile_p = (tile_p // 8) * 8            # keep (8,128) block divisibility
    grid = (pl.cdiv(n_pack, tile_p),)

    batch_spec = lambda cols: pl.BlockSpec((tile_p, cols), lambda i: (i, 0))
    resident = lambda shape: pl.BlockSpec(shape, lambda i: (0, 0))

    out = pl.pallas_call(
        _mlp_reducer_kernel,
        out_shape=jax.ShapeDtypeStruct((n_pack, o * pack), prev_state.dtype),
        grid=grid,
        in_specs=[
            batch_spec(ss * pack),              # prev_state (lane-dense view)
            batch_spec(ms * pack),              # agg_msg (lane-dense view)
            resident((ss * pack, h1 * pack)),   # W1a block-diag (VMEM-resident)
            resident((ms * pack, h1 * pack)),   # W1b block-diag
            resident((1, h1 * pack)),           # b1 (tiled)
            resident((h1 * pack, o * pack)),    # W2 block-diag
            resident((1, o * pack)),            # b2 (tiled)
        ],
        out_specs=batch_spec(o * pack),
        compiler_params=pltpu.CompilerParams(
            dimension_semantics=("parallel",),
            vmem_limit_bytes=48 * 1024 * 1024,
        ),
    )(x1, x2, w1a, w1b, b1t, w2c, b2t)

    new_state = out.reshape(n_pad, o)
    return new_state[:n] if n_pad != n else new_state


if __name__ == "__main__":
    # Sizes implied by the module: Ss = Ms = 32 -> I = H1 = 64, O = Ss = 32.
    Ss, Ms = 32, 32
    I, H1, O = Ss + Ms, Ss + Ms, Ss

    key = jax.random.PRNGKey(0)
    k_w1, k_b1, k_w2, k_b2 = jax.random.split(key, 4)

    # Parameters stored directly in (in_features, out_features) layout.
    w1 = jax.random.normal(k_w1, (I, H1), dtype=jnp.float32) * 0.1
    b1 = jax.random.normal(k_b1, (H1,), dtype=jnp.float32) * 0.1
    w2 = jax.random.normal(k_w2, (H1, O), dtype=jnp.float32) * 0.1
    b2 = jax.random.normal(k_b2, (O,), dtype=jnp.float32) * 0.1

    def ref_fn(ps, am):
        x = jnp.concatenate([ps, am], axis=1)
        return jax.nn.sigmoid(jnp.maximum(x @ w1 + b1, 0.0) @ w2 + b2)

    # N=8 hits the pure lane-dense path; N=10 exercises the pad-to-multiple-
    # of-pack path (tail-row correctness concern from the review).
    for N in (8, 10):
        kp, km = jax.random.split(jax.random.fold_in(key, N))
        prev_state = jax.random.normal(kp, (N, Ss), dtype=jnp.float32)
        agg_msg = jax.random.normal(km, (N, Ms), dtype=jnp.float32)
        ref = ref_fn(prev_state, agg_msg)

        # 1) f32 compute path: tight check against the plain-JAX reference.
        out_f32 = mlp_state_reducer(prev_state, agg_msg, w1, b1, w2, b2,
                                    compute_dtype=jnp.float32)
        jax.block_until_ready(out_f32)
        assert out_f32.shape == (N, O)
        assert jnp.allclose(out_f32, ref, atol=1e-5, rtol=1e-5)

        # 2) bf16 compute path (default, fast): loose check (sigmoid in [0,1]).
        out_bf16 = mlp_state_reducer(prev_state, agg_msg, w1, b1, w2, b2)
        jax.block_until_ready(out_bf16)
        assert out_bf16.shape == (N, O)
        assert jnp.allclose(out_bf16, ref, atol=2e-2, rtol=2e-2)

    print("KERNEL_OK")
</pallas_src>

<mosaic_0001>
module attributes {stable_mosaic.version = 11 : i64} {
  func.func @_mlp_reducer_kernel(%arg0: i32, %arg1: memref<2x128xf32, #tpu.memory_space<vmem>>, %arg2: memref<2x128xf32, #tpu.memory_space<vmem>>, %arg3: memref<128x256xf32, #tpu.memory_space<vmem>>, %arg4: memref<128x256xf32, #tpu.memory_space<vmem>>, %arg5: memref<1x256xf32, #tpu.memory_space<vmem>>, %arg6: memref<256x128xf32, #tpu.memory_space<vmem>>, %arg7: memref<1x128xf32, #tpu.memory_space<vmem>>, %arg8: memref<2x128xf32, #tpu.memory_space<vmem>>) attributes {dimension_semantics = [#tpu.dimension_semantics<parallel>], iteration_bounds = array<i64: 1>, scalar_prefetch = 0 : i64, scratch_operands = 0 : i64, tpu.core_type = #tpu.core_type<tc>, window_params = [{transform_indices = @transform_0, window_bounds = array<i64: 2, 128>}, {transform_indices = @transform_1, window_bounds = array<i64: 2, 128>}, {pipeline_mode = #tpu.pipeline_mode<synchronous>, transform_indices = @transform_2, window_bounds = array<i64: 128, 256>}, {pipeline_mode = #tpu.pipeline_mode<synchronous>, transform_indices = @transform_3, window_bounds = array<i64: 128, 256>}, {pipeline_mode = #tpu.pipeline_mode<synchronous>, transform_indices = @transform_4, window_bounds = array<i64: 1, 256>}, {pipeline_mode = #tpu.pipeline_mode<synchronous>, transform_indices = @transform_5, window_bounds = array<i64: 256, 128>}, {pipeline_mode = #tpu.pipeline_mode<synchronous>, transform_indices = @transform_6, window_bounds = array<i64: 1, 128>}, {transform_indices = @transform_7, window_bounds = array<i64: 2, 128>}]} {
    %c0 = arith.constant 0 : index
    %c0_0 = arith.constant 0 : index
    %0 = vector.load %arg1[%c0, %c0_0] : memref<2x128xf32, #tpu.memory_space<vmem>>, vector<2x128xf32>
    %c0_1 = arith.constant 0 : index
    %c0_2 = arith.constant 0 : index
    %1 = vector.load %arg2[%c0_1, %c0_2] : memref<2x128xf32, #tpu.memory_space<vmem>>, vector<2x128xf32>
    %c0_3 = arith.constant 0 : index
    %c0_4 = arith.constant 0 : index
    %2 = vector.load %arg3[%c0_3, %c0_4] : memref<128x256xf32, #tpu.memory_space<vmem>>, vector<128x256xf32>
    %cst = arith.constant dense<0.000000e+00> : vector<2x256xf32>
    %3 = tpu.matmul %0, %2, %cst {dimension_numbers = #tpu.dot_dimension_numbers<[1], [0], [0], [1], [0, 0, 1, 1], [], []>} : vector<2x128xf32>, vector<128x256xf32>, vector<2x256xf32> -> vector<2x256xf32>
    %c0_5 = arith.constant 0 : index
    %c0_6 = arith.constant 0 : index
    %4 = vector.load %arg4[%c0_5, %c0_6] : memref<128x256xf32, #tpu.memory_space<vmem>>, vector<128x256xf32>
    %cst_7 = arith.constant dense<0.000000e+00> : vector<2x256xf32>
    %5 = tpu.matmul %1, %4, %cst_7 {dimension_numbers = #tpu.dot_dimension_numbers<[1], [0], [0], [1], [0, 0, 1, 1], [], []>} : vector<2x128xf32>, vector<128x256xf32>, vector<2x256xf32> -> vector<2x256xf32>
    %6 = arith.addf %3, %5 : vector<2x256xf32>
    %c0_8 = arith.constant 0 : index
    %c0_9 = arith.constant 0 : index
    %7 = vector.load %arg5[%c0_8, %c0_9] : memref<1x256xf32, #tpu.memory_space<vmem>>, vector<1x256xf32>
    %8 = vector.broadcast %7 : vector<1x256xf32> to vector<2x256xf32>
    %9 = arith.addf %6, %8 : vector<2x256xf32>
    %cst_10 = arith.constant 0.000000e+00 : f32
    %10 = vector.broadcast %cst_10 : f32 to vector<2x256xf32>
    %11 = arith.maximumf %9, %10 : vector<2x256xf32>
    %c0_11 = arith.constant 0 : index
    %c0_12 = arith.constant 0 : index
    %12 = vector.load %arg6[%c0_11, %c0_12] : memref<256x128xf32, #tpu.memory_space<vmem>>, vector<256x128xf32>
    %cst_13 = arith.constant dense<0.000000e+00> : vector<2x128xf32>
    %13 = tpu.matmul %11, %12, %cst_13 {dimension_numbers = #tpu.dot_dimension_numbers<[1], [0], [0], [1], [0, 0, 1, 1], [], []>} : vector<2x256xf32>, vector<256x128xf32>, vector<2x128xf32> -> vector<2x128xf32>
    %c0_14 = arith.constant 0 : index
    %c0_15 = arith.constant 0 : index
    %14 = vector.load %arg7[%c0_14, %c0_15] : memref<1x128xf32, #tpu.memory_space<vmem>>, vector<1x128xf32>
    %15 = vector.broadcast %14 : vector<1x128xf32> to vector<2x128xf32>
    %16 = arith.addf %13, %15 : vector<2x128xf32>
    %17 = arith.negf %16 : vector<2x128xf32>
    %18 = math.exp %17 : vector<2x128xf32>
    %cst_16 = arith.constant 1.000000e+00 : f32
    %19 = vector.broadcast %cst_16 : f32 to vector<2x128xf32>
    %20 = arith.addf %19, %18 : vector<2x128xf32>
    %21 = arith.divf %19, %20 : vector<2x128xf32>
    %c0_17 = arith.constant 0 : index
    %c0_18 = arith.constant 0 : index
    %22 = vector.load %arg8[%c0_17, %c0_18] : memref<2x128xf32, #tpu.memory_space<vmem>>, vector<2x128xf32>
    tpu.vector_store %arg8[%c0_17, %c0_18], %21 {strides = array<i32>} : memref<2x128xf32, #tpu.memory_space<vmem>>, vector<2x128xf32>,
    return
  }
  func.func @transform_0(%arg0: i32) -> (i32, i32) {
    %c0_i32 = arith.constant 0 : i32
    %c0_i32_0 = arith.constant 0 : i32
    return %arg0, %c0_i32 : i32, i32
  }
  func.func @transform_1(%arg0: i32) -> (i32, i32) {
    %c0_i32 = arith.constant 0 : i32
    %c0_i32_0 = arith.constant 0 : i32
    return %arg0, %c0_i32 : i32, i32
  }
  func.func @transform_2(%arg0: i32) -> (i32, i32) {
    %c0_i32 = arith.constant 0 : i32
    %c0_i32_0 = arith.constant 0 : i32
    %c0_i32_1 = arith.constant 0 : i32
    return %c0_i32, %c0_i32_0 : i32, i32
  }
  func.func @transform_3(%arg0: i32) -> (i32, i32) {
    %c0_i32 = arith.constant 0 : i32
    %c0_i32_0 = arith.constant 0 : i32
    %c0_i32_1 = arith.constant 0 : i32
    return %c0_i32, %c0_i32_0 : i32, i32
  }
  func.func @transform_4(%arg0: i32) -> (i32, i32) {
    %c0_i32 = arith.constant 0 : i32
    %c0_i32_0 = arith.constant 0 : i32
    %c0_i32_1 = arith.constant 0 : i32
    return %c0_i32, %c0_i32_0 : i32, i32
  }
  func.func @transform_5(%arg0: i32) -> (i32, i32) {
    %c0_i32 = arith.constant 0 : i32
    %c0_i32_0 = arith.constant 0 : i32
    %c0_i32_1 = arith.constant 0 : i32
    return %c0_i32, %c0_i32_0 : i32, i32
  }
  func.func @transform_6(%arg0: i32) -> (i32, i32) {
    %c0_i32 = arith.constant 0 : i32
    %c0_i32_0 = arith.constant 0 : i32
    %c0_i32_1 = arith.constant 0 : i32
    return %c0_i32, %c0_i32_0 : i32, i32
  }
  func.func @transform_7(%arg0: i32) -> (i32, i32) {
    %c0_i32 = arith.constant 0 : i32
    %c0_i32_0 = arith.constant 0 : i32
    return %arg0, %c0_i32 : i32, i32
  }
}

</mosaic_0001>

<llo_original>
// kernel: tile.13
$region0: #{tile.13}
  #allocation0 [shape = 's32[1]{0}', space=sflag, size = 0x4, scoped, tag = 'scoped memory for tile.13']
  %s0 = inlined_call_operand.vmem [shape: f32[64], index: 0, kind: input, shape index: {}]
  %s1 = inlined_call_operand.vmem [shape: f32[4,64], index: 1, kind: output, shape index: {}]
  // Predicated region
  $region2: #{tile.13} parent=0 // pred_check
    _
  $region3: #{tile.13} parent=0 // pred_check_branch
    %3 = sbr.rel (0) target = $region5
  $region4: #{tile.13} parent=0 // pred_region
    _
  $region5: #{tile.13} parent=0 // pred_fallthru
    _
  %v4 = vld [vmem:[%s0] ss:$0 sm:$0xff]
  %5 = vst [vmem:[%s1] sm:$0xf] %v4

// kernel: tile.14
$region0: #{tile.14}
  %s0 = inlined_call_operand.vmem [shape: f32[4,64], index: 0, kind: input, shape index: {}]
  %s1 = inlined_call_operand.vmem [shape: f32[1,256], index: 1, kind: output, shape index: {}]
  $region1: #{tile.14} parent=0
    #allocation0 [shape = 'u8[8192]{0}', space=vmem, size = 0x2000, scoped, tag = 'scoped mem for output reshape']
    #allocation1 [shape = 'u8[4096]{0}', space=vmem, size = 0x1000, scoped, tag = 'scoped mem for input reshape']
    %s3 = sshllo.u32 0, 4
    %v4 = vld [vmem:[%s0] sm:%s3]
    %5 = vst [vmem:[#allocation1] sm:%s3] %v4
    %s6 = smov 3
    %v7 = vld [vmem:[#allocation1] ss:$2 sm:%s6]
    %vm8 = vcmask 523264
    %9 = vst.msk [vmem:[#allocation0] ss:$8 sm:$0x3] %vm8, %v7
    %s10 = scalar_lea.vmem [#allocation1], 1
    %s11 = smov 3
    %v12 = vld [vmem:[%s10] ss:$2 sm:%s11]
    %13 = vrot.lane.b32.xlu0 %v12, 64
    %v14 = vpop.permute.xlu0 %13
    %vm15 = vcmask 1048064
    %16 = vst.msk [vmem:[#allocation0] ss:$8 sm:$0x3] %vm15, %v14
    %s18 = sshllo.u32 0, 1
    %v20 = vld [vmem:[#allocation0] sm:%s18]
    %s21 = sshllo.u32 0, 1
    %22 = vst [vmem:[%s1] sm:%s21] %v20
    %s23 = scalar_lea.vmem [#allocation0], 8
    %v24 = vld [vmem:[%s23] sm:%s18]
    %s25 = sshllo.u32 0, 1
    %s26 = scalar_lea.vmem %s1, 1
    %27 = vst [vmem:[%s26] sm:%s25] %v24

// kernel: tile.18
$region0: #{tile.18}
  #allocation0 [shape = 's32[1]{0}', space=sflag, size = 0x4, scoped, tag = 'scoped memory for tile.18']
  %s0 = inlined_call_operand.vmem [shape: f32[32], index: 0, kind: input, shape index: {}]
  %s1 = inlined_call_operand.vmem [shape: f32[4,32], index: 1, kind: output, shape index: {}]
  // Predicated region
  $region2: #{tile.18} parent=0 // pred_check
    _
  $region3: #{tile.18} parent=0 // pred_check_branch
    %3 = sbr.rel (0) target = $region5
  $region4: #{tile.18} parent=0 // pred_region
    _
  $region5: #{tile.18} parent=0 // pred_fallthru
    _
  %v4 = vld [vmem:[%s0] ss:$0 sm:$0xff]
  %5 = vst [vmem:[%s1] sm:$0xf] %v4

// kernel: tile.19
$region0: #{tile.19}
  %s0 = inlined_call_operand.vmem [shape: f32[4,32], index: 0, kind: input, shape index: {}]
  %s1 = inlined_call_operand.vmem [shape: f32[1,128], index: 1, kind: output, shape index: {}]
  $region1: #{tile.19} parent=0
    #allocation0 [shape = 'u8[4096]{0}', space=vmem, size = 0x1000, scoped, tag = 'scoped mem for output reshape']
    #allocation1 [shape = 'u8[4096]{0}', space=vmem, size = 0x1000, scoped, tag = 'scoped mem for input reshape']
    %s3 = sshllo.u32 0, 4
    %v4 = vld [vmem:[%s0] sm:%s3]
    %5 = vst [vmem:[#allocation1] sm:%s3] %v4
    %v6 = vld [vmem:[#allocation1] sm:$0x1]
    %vm7 = vcmask 261120
    %8 = vst.msk [vmem:[#allocation0] sm:$0x1] %vm7, %v6
    %s9 = scalar_lea.vmem [#allocation1], 3
    %v10 = vld [vmem:[%s9] sm:$0x1]
    %11 = vrot.lane.b32.xlu0 %v10, 96
    %v12 = vpop.permute.xlu0 %11
    %vm13 = vcmask 1048320
    %14 = vst.msk [vmem:[#allocation0] sm:$0x1] %vm13, %v12
    %s15 = scalar_lea.vmem [#allocation1], 2
    %v16 = vld [vmem:[%s15] sm:$0x1]
    %17 = vrot.lane.b32.xlu0 %v16, 64
    %v18 = vpop.permute.xlu0 %17
    %vm19 = vcmask 785920
    %20 = vst.msk [vmem:[#allocation0] sm:$0x1] %vm19, %v18
    %s21 = scalar_lea.vmem [#allocation1], 1
    %v22 = vld [vmem:[%s21] sm:$0x1]
    %23 = vrot.lane.b32.xlu0 %v22, 32
    %v24 = vpop.permute.xlu0 %23
    %vm25 = vcmask 523520
    %26 = vst.msk [vmem:[#allocation0] sm:$0x1] %vm25, %v24
    %s28 = sshllo.u32 0, 1
    %v30 = vld [vmem:[#allocation0] sm:%s28]
    %s31 = sshllo.u32 0, 1
    %32 = vst [vmem:[%s1] sm:%s31] %v30

// kernel: mlp_state_reducer.1
$region0: #{mlp_state_reducer.1}
  #allocation0 [shape = 'u32[]', space=smem, size = 0x4, offset = 0x4, fixed_abs, tag = 'smem constant byte address 0x4 - core index']
  #allocation1 [shape = 'u32[144,128]{1,0:T(1,128)}', space=vmem, size = 0x12000, scoped, tag = 'internal scratch']
  %s0 = inlined_call_operand.vmem [shape: f32[2,128], index: 0, kind: input, shape index: {}]
  %s1 = inlined_call_operand.vmem [shape: f32[2,128], index: 1, kind: input, shape index: {}]
  %s2 = inlined_call_operand.vmem [shape: f32[128,256], index: 2, kind: input, shape index: {}]
  %s3 = inlined_call_operand.vmem [shape: f32[128,256], index: 3, kind: input, shape index: {}]
  %s4 = inlined_call_operand.vmem [shape: f32[1,256], index: 4, kind: input, shape index: {}]
  %s5 = inlined_call_operand.vmem [shape: f32[256,128], index: 5, kind: input, shape index: {}]
  %s6 = inlined_call_operand.vmem [shape: f32[1,128], index: 6, kind: input, shape index: {}]
  %s7 = inlined_call_operand.vmem [shape: f32[2,128], index: 7, kind: output, shape index: {}]
  %s8 = sld [smem:[#allocation0]]
  $region38: #{mlp_state_reducer.1} parent=0
    _
  %s10 = ssub.s32 1, %s8
  %s11 = scalar_select 0, %s10, %s8
  // Predicated region
  $region2: #{mlp_state_reducer.1} parent=0 // pred_check
    _
  $region3: #{mlp_state_reducer.1} parent=0 // pred_check_branch
    %13 = sbr.rel (0) target = $region5
  $region4: #{mlp_state_reducer.1} parent=0 // pred_region
    _
  $region5: #{mlp_state_reducer.1} parent=0 // pred_fallthru
    _
  // Predicated region
  $region6: #{mlp_state_reducer.1} parent=0 // pred_check
    _
  $region7: #{mlp_state_reducer.1} parent=0 // pred_check_branch
    %15 = sbr.rel (0) target = $region9
  $region8: #{mlp_state_reducer.1} parent=0 // pred_region
    _
  $region9: #{mlp_state_reducer.1} parent=0 // pred_fallthru
    _
  // Predicated region
  $region10: #{mlp_state_reducer.1} parent=0 // pred_check
    _
  $region11: #{mlp_state_reducer.1} parent=0 // pred_check_branch
    %17 = sbr.rel (0) target = $region13
  $region12: #{mlp_state_reducer.1} parent=0 // pred_region
    _
  $region13: #{mlp_state_reducer.1} parent=0 // pred_fallthru
    _
  // Predicated region
  $region14: #{mlp_state_reducer.1} parent=0 // pred_check
    _
  $region15: #{mlp_state_reducer.1} parent=0 // pred_check_branch
    %19 = sbr.rel (0) target = $region17
  $region16: #{mlp_state_reducer.1} parent=0 // pred_region
    _
  $region17: #{mlp_state_reducer.1} parent=0 // pred_fallthru
    _
  // Predicated region
  $region18: #{mlp_state_reducer.1} parent=0 // pred_check
    _
  $region19: #{mlp_state_reducer.1} parent=0 // pred_check_branch
    %21 = sbr.rel (0) target = $region21
  $region20: #{mlp_state_reducer.1} parent=0 // pred_region
    _
  $region21: #{mlp_state_reducer.1} parent=0 // pred_fallthru
    _
  // Predicated region
  $region22: #{mlp_state_reducer.1} parent=0 // pred_check
    _
  $region23: #{mlp_state_reducer.1} parent=0 // pred_check_branch
    %23 = sbr.rel (0) target = $region25
  $region24: #{mlp_state_reducer.1} parent=0 // pred_region
    _
  $region25: #{mlp_state_reducer.1} parent=0 // pred_fallthru
    _
  // Predicated region
  $region26: #{mlp_state_reducer.1} parent=0 // pred_check
    _
  $region27: #{mlp_state_reducer.1} parent=0 // pred_check_branch
    %25 = sbr.rel (0) target = $region29
  $region28: #{mlp_state_reducer.1} parent=0 // pred_region
    _
  $region29: #{mlp_state_reducer.1} parent=0 // pred_fallthru
    _
  %v26 = vld [vmem:[%s0] sm:$0x3]
  %v27 = vld [vmem:[%s1] sm:$0x3]
  %v28 = vld [vmem:[%s2] sm:$0xff]
  %v29 = vld [vmem:[%s2 + $0x8] sm:$0xff]
  %v30 = vld [vmem:[%s2 + $0x10] sm:$0xff]
  %v31 = vld [vmem:[%s2 + $0x18] sm:$0xff]
  %v32 = vld [vmem:[%s2 + $0x20] sm:$0xff]
  %v33 = vld [vmem:[%s2 + $0x28] sm:$0xff]
  %v34 = vld [vmem:[%s2 + $0x30] sm:$0xff]
  %v35 = vld [vmem:[%s2 + $0x38] sm:$0xff]
  %v36 = vld [vmem:[%s2 + $0x40] sm:$0xff]
  %v37 = vld [vmem:[%s2 + $0x48] sm:$0xff]
  %v38 = vld [vmem:[%s2 + $0x50] sm:$0xff]
  %v39 = vld [vmem:[%s2 + $0x58] sm:$0xff]
  %v40 = vld [vmem:[%s2 + $0x60] sm:$0xff]
  %v41 = vld [vmem:[%s2 + $0x68] sm:$0xff]
  %v42 = vld [vmem:[%s2 + $0x70] sm:$0xff]
  %v43 = vld [vmem:[%s2 + $0x78] sm:$0xff]
  %v44 = vld [vmem:[%s2 + $0x80] sm:$0xff]
  %v45 = vld [vmem:[%s2 + $0x88] sm:$0xff]
  %v46 = vld [vmem:[%s2 + $0x90] sm:$0xff]
  %v47 = vld [vmem:[%s2 + $0x98] sm:$0xff]
  %v48 = vld [vmem:[%s2 + $0xa0] sm:$0xff]
  %v49 = vld [vmem:[%s2 + $0xa8] sm:$0xff]
  %v50 = vld [vmem:[%s2 + $0xb0] sm:$0xff]
  %v51 = vld [vmem:[%s2 + $0xb8] sm:$0xff]
  %v52 = vld [vmem:[%s2 + $0xc0] sm:$0xff]
  %v53 = vld [vmem:[%s2 + $0xc8] sm:$0xff]
  %v54 = vld [vmem:[%s2 + $0xd0] sm:$0xff]
  %v55 = vld [vmem:[%s2 + $0xd8] sm:$0xff]
  %v56 = vld [vmem:[%s2 + $0xe0] sm:$0xff]
  %v57 = vld [vmem:[%s2 + $0xe8] sm:$0xff]
  %v58 = vld [vmem:[%s2 + $0xf0] sm:$0xff]
  %v59 = vld [vmem:[%s2 + $0xf8] sm:$0xff]
  %v60 = vld [vmem:[%s3] sm:$0xff]
  %v61 = vld [vmem:[%s3 + $0x8] sm:$0xff]
  %v62 = vld [vmem:[%s3 + $0x10] sm:$0xff]
  %v63 = vld [vmem:[%s3 + $0x18] sm:$0xff]
  %v64 = vld [vmem:[%s3 + $0x20] sm:$0xff]
  %v65 = vld [vmem:[%s3 + $0x28] sm:$0xff]
  %v66 = vld [vmem:[%s3 + $0x30] sm:$0xff]
  %v67 = vld [vmem:[%s3 + $0x38] sm:$0xff]
  %v68 = vld [vmem:[%s3 + $0x40] sm:$0xff]
  %v69 = vld [vmem:[%s3 + $0x48] sm:$0xff]
  %v70 = vld [vmem:[%s3 + $0x50] sm:$0xff]
  %v71 = vld [vmem:[%s3 + $0x58] sm:$0xff]
  %v72 = vld [vmem:[%s3 + $0x60] sm:$0xff]
  %v73 = vld [vmem:[%s3 + $0x68] sm:$0xff]
  %v74 = vld [vmem:[%s3 + $0x70] sm:$0xff]
  %v75 = vld [vmem:[%s3 + $0x78] sm:$0xff]
  %v76 = vld [vmem:[%s3 + $0x80] sm:$0xff]
  %v77 = vld [vmem:[%s3 + $0x88] sm:$0xff]
  %v78 = vld [vmem:[%s3 + $0x90] sm:$0xff]
  %v79 = vld [vmem:[%s3 + $0x98] sm:$0xff]
  %v80 = vld [vmem:[%s3 + $0xa0] sm:$0xff]
  %v81 = vld [vmem:[%s3 + $0xa8] sm:$0xff]
  %v82 = vld [vmem:[%s3 + $0xb0] sm:$0xff]
  %v83 = vld [vmem:[%s3 + $0xb8] sm:$0xff]
  %v84 = vld [vmem:[%s3 + $0xc0] sm:$0xff]
  %v85 = vld [vmem:[%s3 + $0xc8] sm:$0xff]
  %v86 = vld [vmem:[%s3 + $0xd0] sm:$0xff]
  %v87 = vld [vmem:[%s3 + $0xd8] sm:$0xff]
  %v88 = vld [vmem:[%s3 + $0xe0] sm:$0xff]
  %v89 = vld [vmem:[%s3 + $0xe8] sm:$0xff]
  %v90 = vld [vmem:[%s3 + $0xf0] sm:$0xff]
  %v91 = vld [vmem:[%s3 + $0xf8] sm:$0xff]
  %92 = vmatprep.subr.mxu0 %v61
  %93 = vmatpush1.msra.mxu0 %v60
  %94 = vmatprep.subr.mxu0 %v63
  %95 = vmatpush1.msra.mxu0 %v62
  %96 = vmatprep.subr.mxu0 %v65
  %97 = vmatpush1.msra.mxu0 %v64
  %98 = vmatprep.subr.mxu0 %v67
  %99 = vmatpush1.msra.mxu0 %v66
  %100 = vmatprep.subr.mxu0 %v69
  %101 = vmatpush1.msra.mxu0 %v68
  %102 = vmatprep.subr.mxu0 %v71
  %103 = vmatpush1.msra.mxu0 %v70
  %104 = vmatprep.subr.mxu0 %v73
  %105 = vmatpush1.msra.mxu0 %v72
  %106 = vmatprep.subr.mxu0 %v75
  %107 = vmatpush1.msra.mxu0 %v74
  %108 = vmatprep.subr.mxu0 %v77
  %109 = vmatpush1.msra.mxu0 %v76
  %110 = vmatprep.subr.mxu0 %v79
  %111 = vmatpush1.msra.mxu0 %v78
  %112 = vmatprep.subr.mxu0 %v81
  %113 = vmatpush1.msra.mxu0 %v80
  %114 = vmatprep.subr.mxu0 %v83
  %115 = vmatpush1.msra.mxu0 %v82
  %116 = vmatprep.subr.mxu0 %v85
  %117 = vmatpush1.msra.mxu0 %v84
  %118 = vmatprep.subr.mxu0 %v87
  %119 = vmatpush1.msra.mxu0 %v86
  %120 = vmatprep.subr.mxu0 %v89
  %121 = vmatpush1.msra.mxu0 %v88
  %122 = vmatprep.subr.mxu0 %v91
  %123 = vmatpush1.msra.mxu0 %v90
  %124 = vmatprep.subr.mxu0 0.0
  %125 = vmatpush1.msra.mxu0 0.0
  %126 = vmatprep.subr.mxu0 0.0
  %127 = vmatpush1.msra.mxu0 0.0
  %128 = vmatprep.subr.mxu0 0.0
  %129 = vmatpush1.msra.mxu0 0.0
  %130 = vmatprep.subr.mxu0 0.0
  %131 = vmatpush1.msra.mxu0 0.0
  %132 = vmatprep.subr.mxu0 0.0
  %133 = vmatpush1.msra.mxu0 0.0
  %134 = vmatprep.subr.mxu0 0.0
  %135 = vmatpush1.msra.mxu0 0.0
  %136 = vmatprep.subr.mxu0 0.0
  %137 = vmatpush1.msra.mxu0 0.0
  %138 = vmatprep.subr.mxu0 0.0
  %139 = vmatpush1.msra.mxu0 0.0
  %140 = vmatprep.subr.mxu0 0.0
  %141 = vmatpush1.msra.mxu0 0.0
  %142 = vmatprep.subr.mxu0 0.0
  %143 = vmatpush1.msra.mxu0 0.0
  %144 = vmatprep.subr.mxu0 0.0
  %145 = vmatpush1.msra.mxu0 0.0
  %146 = vmatprep.subr.mxu0 0.0
  %147 = vmatpush1.msra.mxu0 0.0
  %148 = vmatprep.subr.mxu0 0.0
  %149 = vmatpush1.msra.mxu0 0.0
  %150 = vmatprep.subr.mxu0 0.0
  %151 = vmatpush1.msra.mxu0 0.0
  %152 = vmatprep.subr.mxu0 0.0
  %153 = vmatpush1.msra.mxu0 0.0
  %154 = vmatprep.subr.mxu0 0.0
  %155 = vmatpush1.msra.mxu0 0.0
  %156 = vmatprep.mubr.f32.mxu0 0.0
  %157 = vmatmul.mubr.f32.gmra.mrb[0].mxu0 %v27
  %v158 = vpop.f32.mrb[0].mxu0
  %v159 = vadd.f32 0.0, %v158
  %v160 = vpop.f32.mrb[0].mxu0
  %v161 = vadd.f32 0.0, %v160
  %162 = vdwg.mxu0
  %163 = vmatprep.subr.mxu0 %v29
  %164 = vmatpush1.msra.mxu0 %v28
  %165 = vmatprep.subr.mxu0 %v31
  %166 = vmatpush1.msra.mxu0 %v30
  %167 = vmatprep.subr.mxu0 %v33
  %168 = vmatpush1.msra.mxu0 %v32
  %169 = vmatprep.subr.mxu0 %v35
  %170 = vmatpush1.msra.mxu0 %v34
  %171 = vmatprep.subr.mxu0 %v37
  %172 = vmatpush1.msra.mxu0 %v36
  %173 = vmatprep.subr.mxu0 %v39
  %174 = vmatpush1.msra.mxu0 %v38
  %175 = vmatprep.subr.mxu0 %v41
  %176 = vmatpush1.msra.mxu0 %v40
  %177 = vmatprep.subr.mxu0 %v43
  %178 = vmatpush1.msra.mxu0 %v42
  %179 = vmatprep.subr.mxu0 %v45
  %180 = vmatpush1.msra.mxu0 %v44
  %181 = vmatprep.subr.mxu0 %v47
  %182 = vmatpush1.msra.mxu0 %v46
  %183 = vmatprep.subr.mxu0 %v49
  %184 = vmatpush1.msra.mxu0 %v48
  %185 = vmatprep.subr.mxu0 %v51
  %186 = vmatpush1.msra.mxu0 %v50
  %187 = vmatprep.subr.mxu0 %v53
  %188 = vmatpush1.msra.mxu0 %v52
  %189 = vmatprep.subr.mxu0 %v55
  %190 = vmatpush1.msra.mxu0 %v54
  %191 = vmatprep.subr.mxu0 %v57
  %192 = vmatpush1.msra.mxu0 %v56
  %193 = vmatprep.subr.mxu0 %v59
  %194 = vmatpush1.msra.mxu0 %v58
  %195 = vmatprep.subr.mxu0 0.0
  %196 = vmatpush1.msra.mxu0 0.0
  %197 = vmatprep.subr.mxu0 0.0
  %198 = vmatpush1.msra.mxu0 0.0
  %199 = vmatprep.subr.mxu0 0.0
  %200 = vmatpush1.msra.mxu0 0.0
  %201 = vmatprep.subr.mxu0 0.0
  %202 = vmatpush1.msra.mxu0 0.0
  %203 = vmatprep.subr.mxu0 0.0
  %204 = vmatpush1.msra.mxu0 0.0
  %205 = vmatprep.subr.mxu0 0.0
  %206 = vmatpush1.msra.mxu0 0.0
  %207 = vmatprep.subr.mxu0 0.0
  %208 = vmatpush1.msra.mxu0 0.0
  %209 = vmatprep.subr.mxu0 0.0
  %210 = vmatpush1.msra.mxu0 0.0
  %211 = vmatprep.subr.mxu0 0.0
  %212 = vmatpush1.msra.mxu0 0.0
  %213 = vmatprep.subr.mxu0 0.0
  %214 = vmatpush1.msra.mxu0 0.0
  %215 = vmatprep.subr.mxu0 0.0
  %216 = vmatpush1.msra.mxu0 0.0
  %217 = vmatprep.subr.mxu0 0.0
  %218 = vmatpush1.msra.mxu0 0.0
  %219 = vmatprep.subr.mxu0 0.0
  %220 = vmatpush1.msra.mxu0 0.0
  %221 = vmatprep.subr.mxu0 0.0
  %222 = vmatpush1.msra.mxu0 0.0
  %223 = vmatprep.subr.mxu0 0.0
  %224 = vmatpush1.msra.mxu0 0.0
  %225 = vmatprep.subr.mxu0 0.0
  %226 = vmatpush1.msra.mxu0 0.0
  %227 = vmatprep.mubr.f32.mxu0 0.0
  %228 = vmatmul.mubr.f32.gmra.mrb[0].mxu0 %v26
  %v229 = vpop.f32.mrb[0].mxu0
  %v230 = vadd.f32 %v159, %v229
  %v231 = vpop.f32.mrb[0].mxu0
  %v232 = vadd.f32 %v161, %v231
  %233 = vdwg.mxu0
  %v234 = vld [vmem:[%s4] sm:$0x3]
  %v236 = vlaneseq
  %v237 = vshrl.u32 %v236, 7
  %v238 = vsub.s32 0, %v237
  %v239 = vrot.slane %v234, %v238
  %v240 = vlaneseq
  %v241 = vshrl.u32 %v240, 7
  %v242 = vsub.s32 1, %v241
  %v243 = vrot.slane %v234, %v242
  %v246 = vadd.f32 %v230, %v239
  %v247 = vadd.f32 %v232, %v243
  %v248 = vmax.f32 %v246, 0.0
  %v249 = vmax.f32 %v247, 0.0
  %v250 = vld [vmem:[%s5] sm:$0xff]
  %v251 = vld [vmem:[%s5 + $0x8] sm:$0xff]
  %v252 = vld [vmem:[%s5 + $0x10] sm:$0xff]
  %v253 = vld [vmem:[%s5 + $0x18] sm:$0xff]
  %v254 = vld [vmem:[%s5 + $0x20] sm:$0xff]
  %v255 = vld [vmem:[%s5 + $0x28] sm:$0xff]
  %v256 = vld [vmem:[%s5 + $0x30] sm:$0xff]
  %v257 = vld [vmem:[%s5 + $0x38] sm:$0xff]
  %v258 = vld [vmem:[%s5 + $0x40] sm:$0xff]
  %v259 = vld [vmem:[%s5 + $0x48] sm:$0xff]
  %v260 = vld [vmem:[%s5 + $0x50] sm:$0xff]
  %v261 = vld [vmem:[%s5 + $0x58] sm:$0xff]
  %v262 = vld [vmem:[%s5 + $0x60] sm:$0xff]
  %v263 = vld [vmem:[%s5 + $0x68] sm:$0xff]
  %v264 = vld [vmem:[%s5 + $0x70] sm:$0xff]
  %v265 = vld [vmem:[%s5 + $0x78] sm:$0xff]
  %v266 = vld [vmem:[%s5 + $0x80] sm:$0xff]
  %v267 = vld [vmem:[%s5 + $0x88] sm:$0xff]
  %v268 = vld [vmem:[%s5 + $0x90] sm:$0xff]
  %v269 = vld [vmem:[%s5 + $0x98] sm:$0xff]
  %v270 = vld [vmem:[%s5 + $0xa0] sm:$0xff]
  %v271 = vld [vmem:[%s5 + $0xa8] sm:$0xff]
  %v272 = vld [vmem:[%s5 + $0xb0] sm:$0xff]
  %v273 = vld [vmem:[%s5 + $0xb8] sm:$0xff]
  %v274 = vld [vmem:[%s5 + $0xc0] sm:$0xff]
  %v275 = vld [vmem:[%s5 + $0xc8] sm:$0xff]
  %v276 = vld [vmem:[%s5 + $0xd0] sm:$0xff]
  %v277 = vld [vmem:[%s5 + $0xd8] sm:$0xff]
  %v278 = vld [vmem:[%s5 + $0xe0] sm:$0xff]
  %v279 = vld [vmem:[%s5 + $0xe8] sm:$0xff]
  %v280 = vld [vmem:[%s5 + $0xf0] sm:$0xff]
  %v281 = vld [vmem:[%s5 + $0xf8] sm:$0xff]
  %v282 = vld [vmem:[%s6] sm:$0x1]
  %v284 = vlaneseq
  %v285 = vshrl.u32 %v284, 7
  %v286 = vsub.s32 0, %v285
  %v287 = vrot.slane %v282, %v286
  %289 = vmatprep.subr.mxu0 0.0
  %290 = vmatpush1.msra.mxu0 %v250
  %291 = vmatprep.subr.mxu0 0.0
  %292 = vmatpush1.msra.mxu0 %v251
  %293 = vmatprep.subr.mxu0 0.0
  %294 = vmatpush1.msra.mxu0 %v252
  %295 = vmatprep.subr.mxu0 0.0
  %296 = vmatpush1.msra.mxu0 %v253
  %297 = vmatprep.subr.mxu0 0.0
  %298 = vmatpush1.msra.mxu0 %v254
  %299 = vmatprep.subr.mxu0 0.0
  %300 = vmatpush1.msra.mxu0 %v255
  %301 = vmatprep.subr.mxu0 0.0
  %302 = vmatpush1.msra.mxu0 %v256
  %303 = vmatprep.subr.mxu0 0.0
  %304 = vmatpush1.msra.mxu0 %v257
  %305 = vmatprep.subr.mxu0 0.0
  %306 = vmatpush1.msra.mxu0 %v258
  %307 = vmatprep.subr.mxu0 0.0
  %308 = vmatpush1.msra.mxu0 %v259
  %309 = vmatprep.subr.mxu0 0.0
  %310 = vmatpush1.msra.mxu0 %v260
  %311 = vmatprep.subr.mxu0 0.0
  %312 = vmatpush1.msra.mxu0 %v261
  %313 = vmatprep.subr.mxu0 0.0
  %314 = vmatpush1.msra.mxu0 %v262
  %315 = vmatprep.subr.mxu0 0.0
  %316 = vmatpush1.msra.mxu0 %v263
  %317 = vmatprep.subr.mxu0 0.0
  %318 = vmatpush1.msra.mxu0 %v264
  %319 = vmatprep.subr.mxu0 0.0
  %320 = vmatpush1.msra.mxu0 %v265
  %321 = vmatprep.subr.mxu0 0.0
  %322 = vmatpush1.msra.mxu0 %v266
  %323 = vmatprep.subr.mxu0 0.0
  %324 = vmatpush1.msra.mxu0 %v267
  %325 = vmatprep.subr.mxu0 0.0
  %326 = vmatpush1.msra.mxu0 %v268
  %327 = vmatprep.subr.mxu0 0.0
  %328 = vmatpush1.msra.mxu0 %v269
  %329 = vmatprep.subr.mxu0 0.0
  %330 = vmatpush1.msra.mxu0 %v270
  %331 = vmatprep.subr.mxu0 0.0
  %332 = vmatpush1.msra.mxu0 %v271
  %333 = vmatprep.subr.mxu0 0.0
  %334 = vmatpush1.msra.mxu0 %v272
  %335 = vmatprep.subr.mxu0 0.0
  %336 = vmatpush1.msra.mxu0 %v273
  %337 = vmatprep.subr.mxu0 0.0
  %338 = vmatpush1.msra.mxu0 %v274
  %339 = vmatprep.subr.mxu0 0.0
  %340 = vmatpush1.msra.mxu0 %v275
  %341 = vmatprep.subr.mxu0 0.0
  %342 = vmatpush1.msra.mxu0 %v276
  %343 = vmatprep.subr.mxu0 0.0
  %344 = vmatpush1.msra.mxu0 %v277
  %345 = vmatprep.subr.mxu0 0.0
  %346 = vmatpush1.msra.mxu0 %v278
  %347 = vmatprep.subr.mxu0 0.0
  %348 = vmatpush1.msra.mxu0 %v279
  %349 = vmatprep.subr.mxu0 0.0
  %350 = vmatpush1.msra.mxu0 %v280
  %351 = vmatprep.subr.mxu0 0.0
  %352 = vmatpush1.msra.mxu0 %v281
  %353 = vmatprep.mubr.f32.mxu0 %v249
  %354 = vmatmul.mubr.f32.gmra.mrb[0].mxu0 %v248
  %v355 = vpop.f32.mrb[0].mxu0
  %v356 = vadd.f32 %v287, %v355
  %v357 = vpop.f32.mrb[0].mxu0
  %358 = vdwg.mxu0
  %v359 = vxor.u32 %v356, 2147483648
  %v360 = vmul.f32 %v359, 1.442695
  %v361 = vpow.pop %v360
  %v362 = vadd.f32 %v361, 1.0
  %v363 = vrcp.pop %v362
  %v364 = vmul.f32 1.0, %v363
  %365 = vst [vmem:[%s7] sm:$0x3] %v364
  // Predicated region
  $region30: #{mlp_state_reducer.1} parent=0 // pred_check
    _
  $region31: #{mlp_state_reducer.1} parent=0 // pred_check_branch
    %367 = sbr.rel (0) target = $region33
  $region32: #{mlp_state_reducer.1} parent=0 // pred_region
    _
  $region33: #{mlp_state_reducer.1} parent=0 // pred_fallthru
    _
  // Predicated region
  $region34: #{mlp_state_reducer.1} parent=0 // pred_check
    _
  $region35: #{mlp_state_reducer.1} parent=0 // pred_check_branch
    %369 = sbr.rel (0) target = $region37
  $region36: #{mlp_state_reducer.1} parent=0 // pred_region
    _
  $region37: #{mlp_state_reducer.1} parent=0 // pred_fallthru
    _

</llo_original>
